<compile_context>
chip_gen: v5e
topology: v5e:2x2
jax: 0.10.0
libtpu: 0.0.40
codegen_flags: <defaults>
</compile_context>

<pallas_src>
import functools

import jax
import jax.numpy as jnp
from jax.experimental import pallas as pl
from jax.experimental.pallas import tpu as pltpu

_LANES = 128
_SUBLANES = 8


def _round_up(x, m):
    return ((x + m - 1) // m) * m


def _center_loss_kernel(x_ref, c_ref, out_ref, *, valid_rows, block_rows):
    # x_ref / c_ref: [block_rows, 128] lane-dense tiles of the flattened B*d stream.
    i = pl.program_id(0)

    # Cast once to f32 before squaring: free (HBM-bound kernel, VPU slack) and avoids
    # per-square bf16 rounding; native on v5e's f32-only VPU.
    diff = (x_ref[...] - c_ref[...]).astype(jnp.float32)
    sq = diff * diff
    per_row = jnp.sum(sq, axis=-1, keepdims=True)  # [block_rows, 1], f32

    # Only the ragged *grid tail* can read unspecified memory (any in-array padding is
    # zeros and already contributes 0).  Keep this a jnp.where lane-select so NaN/Inf
    # in the unspecified rows cannot propagate.
    row_ids = i * block_rows + jax.lax.broadcasted_iota(jnp.int32, per_row.shape, 0)
    per_row = jnp.where(row_ids < valid_rows, per_row, 0.0)

    # Independent per-tile partial sum -> grid axis is truly "parallel".
    out_ref[0, 0] = jnp.sum(per_row)


def center_loss(x, center, *, block_bytes=2 << 20, min_grid_steps=2):
    """Mean squared distance between x and its class centers (Center_Loss.forward)."""
    assert x.shape == center.shape and x.ndim == 2, "x, center must both be [B, d]"
    B, d = x.shape
    total = B * d

    # ---- Lane-dense flat view: (B, d) -> (rows, 128) -------------------------------
    # Row-major reshape of the whole buffer preserves layout (free).  Zero-pad only if
    # B*d is not a multiple of 128 (padded elements contribute (0-0)^2 = 0).
    padded_total = _round_up(total, _LANES)
    xf = x.reshape(-1)
    cf = center.reshape(-1)
    if padded_total != total:
        xf = jnp.pad(xf, (0, padded_total - total))
        cf = jnp.pad(cf, (0, padded_total - total))
    rows = padded_total // _LANES
    xf = xf.reshape(rows, _LANES)
    cf = cf.reshape(rows, _LANES)

    # ---- Tile size: ~block_bytes per input block, real itemsize (bf16-aware) -------
    itemsize = jnp.dtype(x.dtype).itemsize
    bytes_per_row = _LANES * itemsize
    if rows <= _SUBLANES:
        block_rows = rows  # single block covering the full (tiny) row extent
    else:
        block_rows = max(_SUBLANES, (block_bytes // bytes_per_row) // _SUBLANES * _SUBLANES)
        # Give the "parallel" axis at least `min_grid_steps` steps so both v7x
        # TensorCores get work (at most one extra ~0.35 us step on v5e/v6e).
        cap = max(_SUBLANES, _round_up(pl.cdiv(rows, min_grid_steps), _SUBLANES))
        block_rows = min(block_rows, cap)
    grid = pl.cdiv(rows, block_rows)

    # Explicit scoped-VMEM budget: 2 inputs x 2 pipeline buffers + headroom.
    block_in_bytes = block_rows * _LANES * itemsize
    vmem_limit = int(min(100 << 20, max(4 << 20, 4 * block_in_bytes + (4 << 20))))

    kernel = functools.partial(
        _center_loss_kernel, valid_rows=rows, block_rows=block_rows
    )

    partials = pl.pallas_call(
        kernel,
        out_shape=jax.ShapeDtypeStruct((1, grid), jnp.float32),
        grid=(grid,),
        in_specs=[
            pl.BlockSpec((block_rows, _LANES), lambda i: (i, 0)),
            pl.BlockSpec((block_rows, _LANES), lambda i: (i, 0)),
        ],
        # One f32 partial per grid step, written to SMEM (scalars: no (8,128) tiling).
        out_specs=pl.BlockSpec((1, 1), lambda i: (0, i), memory_space=pltpu.SMEM),
        compiler_params=pltpu.CompilerParams(
            dimension_semantics=("parallel",),
            vmem_limit_bytes=vmem_limit,
        ),
    )(xf, cf)

    # Tiny final reduction over per-tile partials + mean over the batch.
    return jnp.sum(partials) / jnp.float32(B)


def center_loss_ref(x, center):
    return jnp.mean(jnp.sum((x.astype(jnp.float32) - center.astype(jnp.float32)) ** 2, axis=-1))


if __name__ == "__main__":
    key = jax.random.PRNGKey(0)
    k1, k2, k3, k4, k5, k6 = jax.random.split(key, 6)

    # Shapes consistent with the module: x, center are [B, d].
    B, d = 8, 32
    x = jax.random.normal(k1, (B, d), dtype=jnp.float32)
    center = jax.random.normal(k2, (B, d), dtype=jnp.float32)
    out = jax.block_until_ready(center_loss(x, center))
    ref = center_loss_ref(x, center)
    assert jnp.allclose(out, ref, rtol=1e-5, atol=1e-5), (out, ref)

    # Batch that does not divide the tile (lane-dense flat view, single block).
    B2, d2 = 20, 32
    x2 = jax.random.normal(k3, (B2, d2), dtype=jnp.float32)
    c2 = jax.random.normal(k4, (B2, d2), dtype=jnp.float32)
    out2 = jax.block_until_ready(center_loss(x2, c2))
    ref2 = center_loss_ref(x2, c2)
    assert jnp.allclose(out2, ref2, rtol=1e-5, atol=1e-5), (out2, ref2)

    # d not a lane multiple and B*d not a multiple of 128: exercises the zero-pad,
    # the multi-step parallel grid, and the ragged-tail row mask.
    B3, d3 = 50, 37
    x3 = jax.random.normal(k5, (B3, d3), dtype=jnp.bfloat16)
    c3 = jax.random.normal(k6, (B3, d3), dtype=jnp.bfloat16)
    out3 = jax.block_until_ready(center_loss(x3, c3))
    ref3 = center_loss_ref(x3, c3)
    assert jnp.allclose(out3, ref3, rtol=2e-2, atol=2e-2), (out3, ref3)

    print("KERNEL_OK")
</pallas_src>

<mosaic_0001>
module attributes {stable_mosaic.version = 11 : i64} {
  func.func @_center_loss_kernel(%arg0: i32, %arg1: memref<2x128xf32, #tpu.memory_space<vmem>>, %arg2: memref<2x128xf32, #tpu.memory_space<vmem>>, %arg3: memref<1x1xf32, #tpu.memory_space<smem>>) attributes {dimension_semantics = [#tpu.dimension_semantics<parallel>], iteration_bounds = array<i64: 1>, scalar_prefetch = 0 : i64, scratch_operands = 0 : i64, tpu.core_type = #tpu.core_type<tc>, window_params = [{transform_indices = @transform_0, window_bounds = array<i64: 2, 128>}, {transform_indices = @transform_1, window_bounds = array<i64: 2, 128>}, {transform_indices = @transform_2, window_bounds = array<i64: 1, 1>}]} {
    %c0 = arith.constant 0 : index
    %c0_0 = arith.constant 0 : index
    %0 = vector.load %arg1[%c0, %c0_0] : memref<2x128xf32, #tpu.memory_space<vmem>>, vector<2x128xf32>
    %c0_1 = arith.constant 0 : index
    %c0_2 = arith.constant 0 : index
    %1 = vector.load %arg2[%c0_1, %c0_2] : memref<2x128xf32, #tpu.memory_space<vmem>>, vector<2x128xf32>
    %2 = arith.subf %0, %1 : vector<2x128xf32>
    %3 = arith.mulf %2, %2 : vector<2x128xf32>
    %cst = arith.constant dense<0.000000e+00> : vector<2xf32>
    %4 = vector.multi_reduction <add>, %3, %cst [1] : vector<2x128xf32> to vector<2xf32>
    %5 = vector.shape_cast %4 : vector<2xf32> to vector<2x1xf32>
    %c2_i32 = arith.constant 2 : i32
    %6 = arith.muli %arg0, %c2_i32 : i32
    %7 = tpu.iota {dimensions = array<i32: 0>} : vector<2x1xi32>
    %8 = vector.broadcast %6 : i32 to vector<2x1xi32>
    %9 = arith.addi %8, %7 : vector<2x1xi32>
    %c2_i32_3 = arith.constant 2 : i32
    %10 = vector.broadcast %c2_i32_3 : i32 to vector<2x1xi32>
    %11 = arith.cmpi slt, %9, %10 : vector<2x1xi32>
    %cst_4 = arith.constant 0.000000e+00 : f32
    %12 = vector.broadcast %cst_4 : f32 to vector<2x1xf32>
    %13 = arith.select %11, %5, %12 : vector<2x1xi1>, vector<2x1xf32>
    %14 = vector.shape_cast %13 : vector<2x1xf32> to vector<1x2x1xf32>
    %cst_5 = arith.constant dense<0.000000e+00> : vector<1xf32>
    %15 = vector.multi_reduction <add>, %14, %cst_5 [1, 2] : vector<1x2x1xf32> to vector<1xf32>
    %16 = vector.shape_cast %15 : vector<1xf32> to vector<1x1x1xf32>
    %17 = vector.extract %16[0, 0, 0] : f32 from vector<1x1x1xf32>
    %c0_6 = arith.constant 0 : index
    %c0_7 = arith.constant 0 : index
    %18 = memref.load %arg3[%c0_6, %c0_7] : memref<1x1xf32, #tpu.memory_space<smem>>
    memref.store %17, %arg3[%c0_6, %c0_7] : memref<1x1xf32, #tpu.memory_space<smem>>
    return
  }
  func.func @transform_0(%arg0: i32) -> (i32, i32) {
    %c0_i32 = arith.constant 0 : i32
    %c0_i32_0 = arith.constant 0 : i32
    return %arg0, %c0_i32 : i32, i32
  }
  func.func @transform_1(%arg0: i32) -> (i32, i32) {
    %c0_i32 = arith.constant 0 : i32
    %c0_i32_0 = arith.constant 0 : i32
    return %arg0, %c0_i32 : i32, i32
  }
  func.func @transform_2(%arg0: i32) -> (i32, i32) {
    %c0_i32 = arith.constant 0 : i32
    %c0_i32_0 = arith.constant 0 : i32
    return %c0_i32, %arg0 : i32, i32
  }
}

</mosaic_0001>

<llo_original>
// kernel: tpu_custom_call.1
$region0: #{tpu_custom_call.1}
  #allocation0 [shape = 'u32[]', space=smem, size = 0x4, offset = 0x4, fixed_abs, tag = 'smem constant byte address 0x4 - core index']
  #allocation1 [shape = 'u32[72,128]{1,0:T(1,128)}', space=vmem, size = 0x9000, scoped, tag = 'internal scratch']
  %s0 = inlined_call_operand.hbm [shape: f32[2,128], index: 0, kind: input, shape index: {}]
  %s1 = inlined_call_operand.hbm [shape: f32[2,128], index: 1, kind: input, shape index: {}]
  %s2 = inlined_call_operand.hbm [shape: f32[1,1], index: 2, kind: output, shape index: {}]
  %s3 = sld [smem:[#allocation0]]
  $region26: #{tpu_custom_call.1} parent=0
    _
  %s5 = ssub.s32 1, %s3
  %s6 = scalar_select 0, %s5, %s3
  $region1: #{tpu_custom_call.1} parent=0
    #allocation2 [shape = 'u8[1024]{0}', space=vmem, size = 0x400, scoped, tag = 'input window, operand 0, single buffered']
    #allocation3 [shape = 's32[1]{0}', space=sflag, size = 0x4, scoped, tag = 'scoped memory for tpu_custom_call.1']
    #allocation4 [shape = 's32[1]{0}', space=sflag, size = 0x4, scoped, tag = 'scoped memory for tpu_custom_call.1']
    #allocation5 [shape = 'u8[1024]{0}', space=vmem, size = 0x400, scoped, tag = 'input window, operand 1, single buffered']
    #allocation6 [shape = 's32[1]{0}', space=sflag, size = 0x4, scoped, tag = 'scoped memory for tpu_custom_call.1']
    #allocation7 [shape = 'u8[512]{0}', space=smem, size = 0x200, scoped, tag = 'output window, operand 0, single buffered']
    %7 = vsyncpa [#allocation3], 0
    %8 = vsyncpa [#allocation6], 0
    %9 = vsyncpa [#allocation4], 0
    // Predicated region
    $region2: #{tpu_custom_call.1} parent=1 // pred_check
      _
    $region3: #{tpu_custom_call.1} parent=1 // pred_check_branch
      %11 = sbr.rel (0) target = $region5
    $region4: #{tpu_custom_call.1} parent=1 // pred_region
      %13 = vsyncadd [#allocation3], 0
      %s15 = sshll.u32 %s0, 4
      %s16 = int_to_ptr.hbm [resolvable:$true] %s15
      %s17 = sshll.u32 [#allocation2], 4
      %s18 = int_to_ptr.vmem [resolvable:$true] %s17
      %20 = dma.hbm_to_vmem [thread:$0]  %s16, 32, %s18, [#allocation3]
    $region5: #{tpu_custom_call.1} parent=1 // pred_fallthru
      _
    // Predicated region
    $region6: #{tpu_custom_call.1} parent=1 // pred_check
      _
    $region7: #{tpu_custom_call.1} parent=1 // pred_check_branch
      %22 = sbr.rel (0) target = $region9
    $region8: #{tpu_custom_call.1} parent=1 // pred_region
      %24 = vsyncadd [#allocation6], 0
      %s26 = sshll.u32 %s1, 4
      %s27 = int_to_ptr.hbm [resolvable:$true] %s26
      %s28 = sshll.u32 [#allocation5], 4
      %s29 = int_to_ptr.vmem [resolvable:$true] %s28
      %31 = dma.hbm_to_vmem [thread:$0]  %s27, 32, %s29, [#allocation6]
    $region9: #{tpu_custom_call.1} parent=1 // pred_fallthru
      _
    // Predicated region
    $region10: #{tpu_custom_call.1} parent=1 // pred_check
      _
    $region11: #{tpu_custom_call.1} parent=1 // pred_check_branch
      %33 = sbr.rel (0) target = $region13
    $region12: #{tpu_custom_call.1} parent=1 // pred_region
      %35 = dma.done [#allocation3], 32
    $region13: #{tpu_custom_call.1} parent=1 // pred_fallthru
      _
    // Predicated region
    $region14: #{tpu_custom_call.1} parent=1 // pred_check
      _
    $region15: #{tpu_custom_call.1} parent=1 // pred_check_branch
      %37 = sbr.rel (0) target = $region17
    $region16: #{tpu_custom_call.1} parent=1 // pred_region
      %39 = dma.done [#allocation6], 32
    $region17: #{tpu_custom_call.1} parent=1 // pred_fallthru
      _
    %v40 = vld [vmem:[#allocation2] sm:$0x3]
    %v41 = vld [vmem:[#allocation5] sm:$0x3]
    %v42 = vsub.f32 %v40, %v41
    %v43 = vmul.f32 %v42, %v42
    %vm44 = vcmask 1041408
    %v45 = vsel %vm44, %v43, 0.0
    %46 = vadd.xlane.f32.xlu0 %v45
    %v47 = vpop.xlane.xlu0 %46
    %s48 = smul.u32 0, 2
    %v49 = vlaneseq
    %v50 = vshrl.u32 %v49, 7
    %v51 = vstv %s48
    %v52 = vadd.s32 %v51, %v50
    %vm53 = vcmp.lt.s32.totalorder %v52, 2
    %v54 = vsel %vm53, %v47, 0.0
    %vm55 = vcmask 1024
    %v56 = vsel %vm55, %v54, 0.0
    %57 = vadd.xlane.f32.xlu0 %v56
    %v58 = vpop.xlane.xlu0 %57
    %v59 = vrot.slane %v58, 4
    %v60 = vadd.f32 %v58, %v59
    %v61 = vrot.slane %v60, 2
    %v62 = vadd.f32 %v60, %v61
    %v63 = vrot.slane %v62, 1
    %v64 = vadd.f32 %v62, %v63
    %s65 = vtos %v64
    %s66 = scalar_lea.smem [#allocation7], 0
    %67 = sst [smem:[%s66]] %s65
    // Predicated region
    $region18: #{tpu_custom_call.1} parent=1 // pred_check
      _
    $region19: #{tpu_custom_call.1} parent=1 // pred_check_branch
      %69 = sbr.rel (0) target = $region21
    $region20: #{tpu_custom_call.1} parent=1 // pred_region
      %71 = vsyncadd [#allocation4], 0
      %s73 = sshll.u32 %s2, 4
      %s74 = int_to_ptr.hbm [resolvable:$true] %s73
      %76 = dma.smem_to_hbm [#allocation7], 16, %s74, [#allocation4]
    $region21: #{tpu_custom_call.1} parent=1 // pred_fallthru
      _
    // Predicated region
    $region22: #{tpu_custom_call.1} parent=1 // pred_check
      _
    $region23: #{tpu_custom_call.1} parent=1 // pred_check_branch
      %78 = sbr.rel (0) target = $region25
    $region24: #{tpu_custom_call.1} parent=1 // pred_region
      %80 = dma.done [#allocation4], 16
    $region25: #{tpu_custom_call.1} parent=1 // pred_fallthru
      _
    %81 = sfence
    %82 = vsyncpa [#allocation3], 1
    %83 = vsyncpa [#allocation6], 1
    %84 = vsyncpa [#allocation4], 1

</llo_original>
